<compile_context>
chip_gen: v7x
topology: tpu7x:2x2x1
jax: 0.10.0
libtpu: 0.0.40
codegen_flags: <defaults>
</compile_context>

<pallas_src>
import functools

import numpy as np

import jax
import jax.numpy as jnp
from jax.experimental import pallas as pl
from jax.experimental.pallas import tpu as pltpu


# ----------------------------------------------------------------------------- #
# Kernel generator: all clauses statically unrolled, one batch tile per grid step
# ----------------------------------------------------------------------------- #
def _make_clause_kernel(clauses):
    """clauses: list of (ant_idx, ant_signs, con_idx, con_signs) Python lists."""

    def kernel(w_ref, x_ref, out_ref):
        # w_ref:   (K,)  SMEM, clause weights (already clipped in the wrapper)
        # x_ref:   (P, TB) VMEM, transposed ground-atom pre-activations
        # out_ref: (P, TB) VMEM, scattered delta (accumulated over all clauses)
        row_cache = {}

        def read_row(i):
            if i not in row_cache:
                row_cache[i] = x_ref[i:i + 1, :]          # static sublane read (1, TB)
            return row_cache[i]

        def signed(i, s):
            r = read_row(i)
            return r if s > 0 else -r

        acc = {}  # consequent predicate index -> accumulated (1, TB) delta row
        for k, (ant_idx, ant_signs, con_idx, con_signs) in enumerate(clauses):
            w = w_ref[k]                                   # scalar, pre-clipped
            ant = [signed(i, s) for i, s in zip(ant_idx, ant_signs)]
            con = [signed(i, s) for i, s in zip(con_idx, con_signs)]

            t_a = functools.reduce(jnp.minimum, ant)       # Goedel t-norm (antecedent)
            t_c = functools.reduce(jnp.maximum, con)       # Goedel t-conorm (consequent)

            e = [jnp.exp(c - t_c) for c in con]            # softmax numerators
            denom = functools.reduce(jnp.add, e)
            gate = 1.0 / (1.0 + jnp.exp(t_c - t_a))        # sigmoid(t_a - t_c) residuum gate
            scale = (gate * w) / denom                     # one divide per clause

            for j, (i, s) in enumerate(zip(con_idx, con_signs)):
                d = scale * e[j]
                d = d if s > 0 else -d
                acc[i] = d if i not in acc else acc[i] + d

        out_ref[...] = jnp.zeros_like(out_ref)
        for i, row in acc.items():
            out_ref[i:i + 1, :] = row                      # static sublane row write

    return kernel


# ----------------------------------------------------------------------------- #
# pallas_call wrapper
# ----------------------------------------------------------------------------- #
def _round_up(x, m):
    return ((x + m - 1) // m) * m


def _choose_batch_tile(batch, block_b):
    b128 = _round_up(max(int(batch), 1), 128)
    tb = _round_up(min(int(block_b), b128), 128)
    # Keep >= 2 parallel batch tiles when the batch allows it, so both of v7x's
    # TensorCores get work (one extra grid step is negligible on v5e/v6e).
    if b128 // tb < 2 and b128 >= 256:
        tb = _round_up((b128 + 1) // 2, 128)
    return tb


def _clause_stack_call(ground_atoms, weights, clauses, min_weight, max_weight,
                       block_b=4096):
    x = ground_atoms.astype(jnp.float32)
    B, P = x.shape

    tb = _choose_batch_tile(B, block_b)
    bp = _round_up(B, tb)
    x_t = x.T                                   # (P, B): predicates on sublanes, batch on lanes
    if bp != B:
        x_t = jnp.pad(x_t, ((0, 0), (0, bp - B)))
    nb = bp // tb

    w = jnp.clip(weights.astype(jnp.float32), float(min_weight), float(max_weight))
    kernel = _make_clause_kernel(clauses)

    grid_spec = pltpu.PrefetchScalarGridSpec(
        num_scalar_prefetch=0,
        grid=(nb,),
        in_specs=[
            pl.BlockSpec(memory_space=pltpu.MemorySpace.SMEM),   # clipped weights (K,)
            pl.BlockSpec((P, tb), lambda i: (0, i)),             # x^T batch tile
        ],
        out_specs=pl.BlockSpec((P, tb), lambda i: (0, i)),
    )

    out_t = pl.pallas_call(
        kernel,
        out_shape=jax.ShapeDtypeStruct((P, bp), jnp.float32),
        grid_spec=grid_spec,
        compiler_params=pltpu.CompilerParams(
            dimension_semantics=("parallel",),
            vmem_limit_bytes=32 * 1024 * 1024,   # fits v7x's 64 MiB physical VMEM too
        ),
    )(w, x_t)

    scattered_t = out_t[:, :B] if bp != B else out_t
    return scattered_t.T                          # back to [B, P]


# ----------------------------------------------------------------------------- #
# Clause parsing (glue, plain Python)
# ----------------------------------------------------------------------------- #
def _parse_clause(available_predicates, formula_string, initial_clause_weight):
    weight_string, clause_string = formula_string.split(':')
    weight = float(initial_clause_weight) if weight_string == '_' else float(weight_string)
    antecedent_str, consequent_str = clause_string.split('->')

    def parse(literal_string, sep):
        idx, signs = [], []
        for literal in literal_string.split(sep):
            sign = 1.0
            if literal[0] == 'n':
                sign = -1.0
                literal = literal[1:]
            idx.append(available_predicates.index(literal))
            signs.append(sign)
        return idx, signs

    ant_idx, ant_signs = parse(antecedent_str, ';')
    con_idx, con_signs = parse(consequent_str, ',')
    return weight, clause_string, ant_idx, ant_signs, con_idx, con_signs


# ----------------------------------------------------------------------------- #
# Module wrappers
# ----------------------------------------------------------------------------- #
class ClauseEnhancerPallas:
    """Single-clause enhancer, matching ClauseEnhancerImpl.forward semantics."""

    def __init__(self, available_predicates, formula_string, initial_clause_weight,
                 min_weight=0.0, max_weight=500.0):
        (weight, clause_string, ant_idx, ant_signs,
         con_idx, con_signs) = _parse_clause(available_predicates, formula_string,
                                             initial_clause_weight)
        self.formula_string = clause_string
        self.antecedent_literal_indices = ant_idx
        self.consequent_literal_indices = con_idx
        self.min_weight = float(min_weight)
        self.max_weight = float(max_weight)
        self.clauses = [(ant_idx, ant_signs, con_idx, con_signs)]
        self.weights = jnp.asarray([weight], jnp.float32)
        # delta is recovered from `scattered` by a static column gather.
        # TODO(synk): if the same predicate appears twice in the consequent, the kernel
        # sums contributions in `scattered` and this gather no longer recovers delta.
        self._con_gather = jnp.asarray(con_idx, jnp.int32)

    def __call__(self, ground_atoms, block_b=4096):
        """Returns (scattered_delta [B, P], delta [B, nC])."""
        scattered = _clause_stack_call(ground_atoms, self.weights, self.clauses,
                                       self.min_weight, self.max_weight,
                                       block_b=block_b)
        delta = jnp.take(scattered, self._con_gather, axis=-1)
        return scattered, delta


class FusedClauseEnhancerPallas:
    """All clauses of a knowledge base fused into ONE pallas_call.

    Returns the summed scattered delta [B, P] (the quantity KENN adds to the
    ground-atom pre-activations).
    TODO(synk): per-clause deltas are not returned by the fused path; use
    ClauseEnhancerPallas if you need them.
    """

    def __init__(self, available_predicates, formula_strings, initial_clause_weight,
                 min_weight=0.0, max_weight=500.0):
        self.min_weight = float(min_weight)
        self.max_weight = float(max_weight)
        self.clauses = []
        weights = []
        for fs in formula_strings:
            (w, _, ant_idx, ant_signs, con_idx, con_signs) = _parse_clause(
                available_predicates, fs, initial_clause_weight)
            weights.append(w)
            self.clauses.append((ant_idx, ant_signs, con_idx, con_signs))
        self.weights = jnp.asarray(weights, jnp.float32)

    def __call__(self, ground_atoms, block_b=4096):
        return _clause_stack_call(ground_atoms, self.weights, self.clauses,
                                  self.min_weight, self.max_weight,
                                  block_b=block_b)


# ----------------------------------------------------------------------------- #
# Pure-JAX reference (same math, for correctness check)
# ----------------------------------------------------------------------------- #
def _reference_scattered(x, weights, clauses, min_weight, max_weight):
    x = x.astype(jnp.float32)
    out = jnp.zeros_like(x)
    for k, (ant_idx, ant_signs, con_idx, con_signs) in enumerate(clauses):
        w = jnp.clip(weights[k], min_weight, max_weight)
        a = x[:, jnp.asarray(ant_idx)] * jnp.asarray(ant_signs, jnp.float32)
        c = x[:, jnp.asarray(con_idx)] * jnp.asarray(con_signs, jnp.float32)
        t_a = jnp.min(a, axis=-1, keepdims=True)
        t_c = jnp.max(c, axis=-1, keepdims=True)
        e = jnp.exp(c - t_c)
        p = e / jnp.sum(e, axis=-1, keepdims=True)
        gate = 1.0 / (1.0 + jnp.exp(t_c - t_a))
        delta = (w * gate) * p * jnp.asarray(con_signs, jnp.float32)
        out = out + jnp.zeros_like(out).at[:, jnp.asarray(con_idx)].add(delta)
    return out


# ----------------------------------------------------------------------------- #
# Example run
# ----------------------------------------------------------------------------- #
if __name__ == "__main__":
    P = 16
    available_predicates = [f"P{i}" for i in range(P)]
    key = jax.random.PRNGKey(0)

    # --- single clause (matches the PyTorch module) -------------------------- #
    B = 8
    formula_string = "_:P0;nP3->P5,nP7"   # P0 AND NOT P3 -> P5 OR NOT P7, weight "_"
    enhancer = ClauseEnhancerPallas(available_predicates, formula_string,
                                    initial_clause_weight=0.5)
    ground_atoms = jax.random.normal(key, (B, P), dtype=jnp.float32)

    scattered_delta, delta = enhancer(ground_atoms)
    jax.block_until_ready((scattered_delta, delta))
    assert scattered_delta.shape == (B, P)
    assert delta.shape == (B, 2)

    ref_scattered = _reference_scattered(ground_atoms, enhancer.weights,
                                         enhancer.clauses, enhancer.min_weight,
                                         enhancer.max_weight)
    np.testing.assert_allclose(np.asarray(scattered_delta), np.asarray(ref_scattered),
                               rtol=1e-3, atol=1e-3)
    np.testing.assert_allclose(
        np.asarray(delta),
        np.asarray(ref_scattered[:, jnp.asarray(enhancer.consequent_literal_indices)]),
        rtol=1e-3, atol=1e-3)

    # --- fused knowledge base: 3 clauses, multi-tile batch grid -------------- #
    B2 = 300
    formulas = [
        "_:P0;nP3->P5,nP7",
        "2.0:P1->P2",
        "_:nP4;P6;P8->P9,nP10,P11",
    ]
    fused = FusedClauseEnhancerPallas(available_predicates, formulas,
                                      initial_clause_weight=0.5)
    ground_atoms2 = jax.random.normal(jax.random.PRNGKey(0), (B2, P), dtype=jnp.float32)

    fused_scattered = fused(ground_atoms2, block_b=128)   # grid = 3 batch tiles of 128 lanes
    jax.block_until_ready(fused_scattered)
    assert fused_scattered.shape == (B2, P)

    ref_fused = _reference_scattered(ground_atoms2, fused.weights, fused.clauses,
                                     fused.min_weight, fused.max_weight)
    np.testing.assert_allclose(np.asarray(fused_scattered), np.asarray(ref_fused),
                               rtol=1e-3, atol=1e-3)

    print("KERNEL_OK")
</pallas_src>

<mosaic_0001>
module attributes {stable_mosaic.version = 11 : i64} {
  func.func @kernel(%arg0: i32, %arg1: memref<1xf32, #tpu.memory_space<smem>>, %arg2: memref<16x128xf32, #tpu.memory_space<vmem>>, %arg3: memref<16x128xf32, #tpu.memory_space<vmem>>) attributes {dimension_semantics = [#tpu.dimension_semantics<parallel>], iteration_bounds = array<i64: 1>, scalar_prefetch = 0 : i64, scratch_operands = 0 : i64, tpu.core_type = #tpu.core_type<tc>, window_params = [{transform_indices = @transform_0, window_bounds = array<i64: 1>}, {transform_indices = @transform_1, window_bounds = array<i64: 16, 128>}, {transform_indices = @transform_2, window_bounds = array<i64: 16, 128>}]} {
    %c0 = arith.constant 0 : index
    %0 = memref.load %arg1[%c0] : memref<1xf32, #tpu.memory_space<smem>>
    %c0_0 = arith.constant 0 : index
    %c0_1 = arith.constant 0 : index
    %1 = vector.load %arg2[%c0_0, %c0_1] : memref<16x128xf32, #tpu.memory_space<vmem>>, vector<1x128xf32>
    %c3 = arith.constant 3 : index
    %c0_2 = arith.constant 0 : index
    %2 = vector.load %arg2[%c3, %c0_2] : memref<16x128xf32, #tpu.memory_space<vmem>>, vector<1x128xf32>
    %cst = arith.constant 0.000000e+00 : f32
    %3 = vector.broadcast %cst : f32 to vector<1x128xf32>
    %4 = arith.subf %3, %2 : vector<1x128xf32>
    %c5 = arith.constant 5 : index
    %c0_3 = arith.constant 0 : index
    %5 = vector.load %arg2[%c5, %c0_3] : memref<16x128xf32, #tpu.memory_space<vmem>>, vector<1x128xf32>
    %c7 = arith.constant 7 : index
    %c0_4 = arith.constant 0 : index
    %6 = vector.load %arg2[%c7, %c0_4] : memref<16x128xf32, #tpu.memory_space<vmem>>, vector<1x128xf32>
    %cst_5 = arith.constant 0.000000e+00 : f32
    %7 = vector.broadcast %cst_5 : f32 to vector<1x128xf32>
    %8 = arith.subf %7, %6 : vector<1x128xf32>
    %9 = arith.minimumf %1, %4 : vector<1x128xf32>
    %10 = arith.maximumf %5, %8 : vector<1x128xf32>
    %11 = arith.subf %5, %10 : vector<1x128xf32>
    %12 = math.exp %11 : vector<1x128xf32>
    %13 = arith.subf %8, %10 : vector<1x128xf32>
    %14 = math.exp %13 : vector<1x128xf32>
    %15 = arith.addf %12, %14 : vector<1x128xf32>
    %16 = arith.subf %10, %9 : vector<1x128xf32>
    %17 = math.exp %16 : vector<1x128xf32>
    %cst_6 = arith.constant 1.000000e+00 : f32
    %18 = vector.broadcast %cst_6 : f32 to vector<1x128xf32>
    %19 = arith.addf %18, %17 : vector<1x128xf32>
    %cst_7 = arith.constant 1.000000e+00 : f32
    %20 = vector.broadcast %cst_7 : f32 to vector<1x128xf32>
    %21 = arith.divf %20, %19 : vector<1x128xf32>
    %22 = vector.broadcast %0 : f32 to vector<1x128xf32>
    %23 = arith.mulf %21, %22 : vector<1x128xf32>
    %24 = arith.divf %23, %15 : vector<1x128xf32>
    %25 = arith.mulf %24, %12 : vector<1x128xf32>
    %26 = arith.mulf %24, %14 : vector<1x128xf32>
    %cst_8 = arith.constant 0.000000e+00 : f32
    %27 = vector.broadcast %cst_8 : f32 to vector<1x128xf32>
    %28 = arith.subf %27, %26 : vector<1x128xf32>
    %cst_9 = arith.constant 0.000000e+00 : f32
    %29 = vector.broadcast %cst_9 : f32 to vector<16x128xf32>
    %c0_10 = arith.constant 0 : index
    %c0_11 = arith.constant 0 : index
    %30 = vector.load %arg3[%c0_10, %c0_11] : memref<16x128xf32, #tpu.memory_space<vmem>>, vector<16x128xf32>
    tpu.vector_store %arg3[%c0_10, %c0_11], %29 {strides = array<i32>} : memref<16x128xf32, #tpu.memory_space<vmem>>, vector<16x128xf32>,
    %c5_12 = arith.constant 5 : index
    %c0_13 = arith.constant 0 : index
    %31 = vector.load %arg3[%c5_12, %c0_13] : memref<16x128xf32, #tpu.memory_space<vmem>>, vector<1x128xf32>
    tpu.vector_store %arg3[%c5_12, %c0_13], %25 {strides = array<i32>} : memref<16x128xf32, #tpu.memory_space<vmem>>, vector<1x128xf32>,
    %c7_14 = arith.constant 7 : index
    %c0_15 = arith.constant 0 : index
    %32 = vector.load %arg3[%c7_14, %c0_15] : memref<16x128xf32, #tpu.memory_space<vmem>>, vector<1x128xf32>
    tpu.vector_store %arg3[%c7_14, %c0_15], %28 {strides = array<i32>} : memref<16x128xf32, #tpu.memory_space<vmem>>, vector<1x128xf32>,
    return
  }
  func.func @transform_0(%arg0: i32) -> i32 {
    %c0_i32 = arith.constant 0 : i32
    %c0_i32_0 = arith.constant 0 : i32
    return %c0_i32 : i32
  }
  func.func @transform_1(%arg0: i32) -> (i32, i32) {
    %c0_i32 = arith.constant 0 : i32
    %c0_i32_0 = arith.constant 0 : i32
    return %c0_i32, %arg0 : i32, i32
  }
  func.func @transform_2(%arg0: i32) -> (i32, i32) {
    %c0_i32 = arith.constant 0 : i32
    %c0_i32_0 = arith.constant 0 : i32
    return %c0_i32, %arg0 : i32, i32
  }
}

</mosaic_0001>

<llo_original>
// kernel: tpu_custom_call.1
$region0: #{tpu_custom_call.1}
  #allocation0 [shape = 'u32[]', space=smem, size = 0x4, offset = 0x4, fixed_abs, tag = 'smem constant byte address 0x4 - core index']
  #allocation1 [shape = 'u32[144,128]{1,0:T(1,128)}', space=vmem, size = 0x12000, scoped, tag = 'internal scratch']
  #allocation2 [shape = 'f32[1]{0:T(128)S(6)}', space=smem, size = 0x200, scoped, tag = 'scoped memory for tpu_custom_call.1']
  %s0 = inlined_call_operand.<no memory space> [shape: f32[1], index: 0, kind: input, shape index: {}]
  %s1 = inlined_call_operand.hbm [shape: f32[16,128], index: 1, kind: input, shape index: {}]
  %s2 = inlined_call_operand.hbm [shape: f32[16,128], index: 2, kind: output, shape index: {}]
  %s3 = sld [smem:[#allocation0]]
  $region22: #{tpu_custom_call.1} parent=0
    _
  %s5 = ssub.s32 1, %s3
  %s6 = scalar_select 0, %s5, %s3
  %7 = sst [smem:[#allocation2]] %s0
  $region1: #{tpu_custom_call.1} parent=0
    #allocation3 [shape = 'u8[8192]{0}', space=vmem, size = 0x2000, scoped, tag = 'input window, operand 1, single buffered']
    #allocation4 [shape = 's32[1]{0}', space=sflag, size = 0x4, scoped, tag = 'scoped memory for tpu_custom_call.1']
    #allocation5 [shape = 's32[1]{0}', space=sflag, size = 0x4, scoped, tag = 'scoped memory for tpu_custom_call.1']
    #allocation6 [shape = 'u8[8192]{0}', space=vmem, size = 0x2000, scoped, tag = 'output window, operand 0, single buffered']
    %8 = vsyncpa [#allocation4], 0
    %9 = vsyncpa [#allocation5], 0
    // Predicated region
    $region2: #{tpu_custom_call.1} parent=1 // pred_check
      _
    $region3: #{tpu_custom_call.1} parent=1 // pred_check_branch
      %11 = sbr.rel (0) target = $region5
    $region4: #{tpu_custom_call.1} parent=1 // pred_region
      _
    $region5: #{tpu_custom_call.1} parent=1 // pred_fallthru
      _
    // Predicated region
    $region6: #{tpu_custom_call.1} parent=1 // pred_check
      _
    $region7: #{tpu_custom_call.1} parent=1 // pred_check_branch
      %13 = sbr.rel (0) target = $region9
    $region8: #{tpu_custom_call.1} parent=1 // pred_region
      %s15 = ssub.s32 256, 256
      %16 = vsyncadd [#allocation4], %s15
      %s17 = sshll.u32 [#allocation3], 4
      %s18 = int_to_ptr.vmem [resolvable:$true] %s17
      %23 = dma.hbm_to_vmem [thread:$0]  %s1, 256, %s18, [#allocation4], 128, 128, 8
    $region9: #{tpu_custom_call.1} parent=1 // pred_fallthru
      _
    // Predicated region
    $region10: #{tpu_custom_call.1} parent=1 // pred_check
      _
    $region11: #{tpu_custom_call.1} parent=1 // pred_check_branch
      %25 = sbr.rel (0) target = $region13
    $region12: #{tpu_custom_call.1} parent=1 // pred_region
      %26 = dma.done [#allocation4], 256
    $region13: #{tpu_custom_call.1} parent=1 // pred_fallthru
      _
    %s27 = sld [smem:[#allocation2]]
    %v28 = vld [vmem:[#allocation3] sm:$0x1]
    %v29 = vld [vmem:[#allocation3 + $0x3] sm:$0x1]
    %v30 = vsub.f32 0.0, %v29
    %v31 = vld [vmem:[#allocation3 + $0x5] sm:$0x1]
    %v32 = vld [vmem:[#allocation3 + $0x7] sm:$0x1]
    %v33 = vsub.f32 0.0, %v32
    %v34 = vmin.f32 %v28, %v30
    %v35 = vmax.f32 %v31, %v33
    %v36 = vsub.f32 %v31, %v35
    %v37 = vmul.f32 %v36, 1.442695
    %v38 = vpow.pop %v37
    %v39 = vsub.f32 %v33, %v35
    %v40 = vmul.f32 %v39, 1.442695
    %v41 = vpow.pop %v40
    %v42 = vadd.f32 %v38, %v41
    %v43 = vsub.f32 %v35, %v34
    %v44 = vmul.f32 %v43, 1.442695
    %v45 = vpow.pop %v44
    %v46 = vadd.f32 %v45, 1.0
    %v47 = vrcp.pop %v46
    %v48 = vmul.f32 1.0, %v47
    %v49 = vstv %s27
    %v50 = vmul.f32 %v48, %v49
    %v51 = vrcp.pop %v42
    %v52 = vmul.f32 %v50, %v51
    %v53 = vmul.f32 %v52, %v38
    %v54 = vmul.f32 %v52, %v41
    %v55 = vsub.f32 0.0, %v54
    %56 = vst [vmem:[#allocation6] sm:$0xff] 0.0
    %57 = vst [vmem:[#allocation6 + $0x8] sm:$0xff] 0.0
    %58 = vst [vmem:[#allocation6 + $0x5] sm:$0x1] %v53
    %59 = vst [vmem:[#allocation6 + $0x7] sm:$0x1] %v55
    // Predicated region
    $region14: #{tpu_custom_call.1} parent=1 // pred_check
      _
    $region15: #{tpu_custom_call.1} parent=1 // pred_check_branch
      %61 = sbr.rel (0) target = $region17
    $region16: #{tpu_custom_call.1} parent=1 // pred_region
      %s63 = ssub.s32 256, 256
      %64 = vsyncadd [#allocation5], %s63
      %s65 = sshll.u32 [#allocation6], 4
      %s66 = int_to_ptr.vmem [resolvable:$true] %s65
      %71 = dma.vmem_to_hbm [thread:$0]  %s66, 256, %s2, [#allocation5], 128, 128, 8
    $region17: #{tpu_custom_call.1} parent=1 // pred_fallthru
      _
    // Predicated region
    $region18: #{tpu_custom_call.1} parent=1 // pred_check
      _
    $region19: #{tpu_custom_call.1} parent=1 // pred_check_branch
      %73 = sbr.rel (0) target = $region21
    $region20: #{tpu_custom_call.1} parent=1 // pred_region
      %74 = dma.done [#allocation5], 256
    $region21: #{tpu_custom_call.1} parent=1 // pred_fallthru
      _
    %75 = vsyncpa [#allocation4], 1
    %76 = vsyncpa [#allocation5], 1

</llo_original>
